<compile_context>
chip_gen: v5e
topology: v5e:2x2
jax: 0.10.0
libtpu: 0.0.40
codegen_flags: <defaults>
</compile_context>

<pallas_src>
import functools

import jax
import jax.numpy as jnp
from jax.experimental import pallas as pl
from jax.experimental.pallas import tpu as pltpu

_MIB = 1024 * 1024


def _round_up(a, b):
    return (a + b - 1) // b * b


def _vmem_capacity_bytes():
    """Trace-time VMEM capacity; conservative (v7x-sized) fallback."""
    try:
        info = pltpu.get_tpu_info()
        cap = getattr(info, "vmem_capacity_bytes", None)
        if cap:
            return int(cap)
    except Exception:
        pass
    return 64 * _MIB


# ----------------------------------------------------------------------------
# Fused single-pass kernel: pool + FC1 + LeakyReLU + FC2 + sigmoid + rescale.
# Per-sample math is statically unrolled (bn <= 8) so every op stays in the
# proven 2-D (C, S)/(C, 1) layouts; block last dims equal the full array dims,
# so ragged S needs no padding and no masking.
# ----------------------------------------------------------------------------
def _se_fused_kernel(x_ref, w1_ref, b1_ref, w2_ref, b2_ref, o_ref, *, inv_s, bn):
    for j in range(bn):
        xj = x_ref[j]                                                    # (C, S)
        pooled = jnp.sum(xj.astype(jnp.float32), axis=-1,
                         keepdims=True) * inv_s                          # (C, 1)
        y1 = jnp.dot(w1_ref[...], pooled,
                     preferred_element_type=jnp.float32) + b1_ref[...]   # (Cr, 1)
        y1 = jnp.where(y1 > 0, y1, 0.1 * y1)                             # LeakyReLU(0.1)
        y2 = jnp.dot(w2_ref[...], y1,
                     preferred_element_type=jnp.float32) + b2_ref[...]   # (C, 1)
        scale = pl.reciprocal(1.0 + jnp.exp(-y2))                        # sigmoid, exact
        o_ref[j] = (xj * scale).astype(o_ref.dtype)


# ----------------------------------------------------------------------------
# Two-pass path, pass A: per-(n, spatial-partition) partial sums.  The output
# block stays resident across the innermost ("arbitrary") S axis and is used
# directly as the accumulator.  The tail of the last tile (and any clamped
# duplicate tile when the partition split does not divide the tile count) is
# masked via a lane iota against the true spatial size.
# ----------------------------------------------------------------------------
def _partial_pool_kernel(x_ref, part_ref, *, ts, spp, s_total):
    p = pl.program_id(1)
    s = pl.program_id(2)

    @pl.when(s == 0)
    def _init():
        part_ref[...] = jnp.zeros_like(part_ref)

    base = (p * spp + s) * ts
    xb = x_ref[0].astype(jnp.float32)                                    # (C, ts)
    offs = base + jax.lax.broadcasted_iota(jnp.int32, xb.shape, 1)
    xm = jnp.where(offs < s_total, xb, 0.0)
    psum = jnp.sum(xm, axis=-1, keepdims=True)                           # (C, 1)
    part_ref[...] = part_ref[...] + psum.reshape(part_ref.shape)


# ----------------------------------------------------------------------------
# Two-pass path, excite: combine partial sums, FC1 -> LeakyReLU -> FC2 -> sigmoid.
# ----------------------------------------------------------------------------
def _excite_kernel(part_ref, w1_ref, b1_ref, w2_ref, b2_ref, scale_ref, *,
                   inv_s, n_split):
    part = part_ref[...]                                                 # (1, P, C, 1)
    pooled = part[0, 0]
    for p in range(1, n_split):
        pooled = pooled + part[0, p]
    pooled = pooled * inv_s                                              # (C, 1)
    y1 = jnp.dot(w1_ref[...], pooled,
                 preferred_element_type=jnp.float32) + b1_ref[...]       # (Cr, 1)
    y1 = jnp.where(y1 > 0, y1, 0.1 * y1)
    y2 = jnp.dot(w2_ref[...], y1,
                 preferred_element_type=jnp.float32) + b2_ref[...]       # (C, 1)
    scale_ref[0] = pl.reciprocal(1.0 + jnp.exp(-y2))                     # sigmoid


# ----------------------------------------------------------------------------
# Two-pass path, pass B: streaming channel-wise rescale.
# ----------------------------------------------------------------------------
def _scale_mul_kernel(x_ref, scale_ref, o_ref):
    # x_ref[0]: (C, ts); scale_ref[0]: (C, 1) broadcast over the lane axis.
    # Ragged tails rely on Pallas' masked writeback of partial output blocks.
    o_ref[0] = (x_ref[0] * scale_ref[0]).astype(o_ref.dtype)


# ----------------------------------------------------------------------------
# Wrapper
# ----------------------------------------------------------------------------
def se_block_3d(x, w1, b1, w2, b2, *, fused_vmem_budget=None,
                spatial_block_bytes=None, batch_block=None, split_spatial=None):
    """SEblock3D forward.  x: (N, C, D, H, W); w1: (C//4, C); b1: (C//4,);
    w2: (C, C//4); b2: (C,).  The 1x1x1 Conv3d kernels are plain matvecs."""
    N, C, D, H, W = x.shape
    Cr = w1.shape[0]
    S = D * H * W
    itemsize = x.dtype.itemsize

    # Lane-dense layout; no padding and no de-pad slice for ragged S.
    x_flat = x.reshape(N, C, S)
    b1c = b1.reshape(Cr, 1)
    b2c = b2.reshape(C, 1)

    # ---- generation-aware VMEM / block-byte budgets -------------------------
    vmem_cap = _vmem_capacity_bytes()
    if vmem_cap >= 96 * _MIB:              # v5e / v6e: 128 MiB physical VMEM
        vmem_limit = min(100 * _MIB, int(vmem_cap * 0.8))
        target_block_bytes = 2 * _MIB
    else:                                  # v7x: 64 MiB physical (32 MiB scoped)
        vmem_limit = min(48 * _MIB, int(vmem_cap * 0.75))
        target_block_bytes = 4 * _MIB      # faster HBM -> bigger blocks needed
    if spatial_block_bytes is not None:
        target_block_bytes = max(int(spatial_block_bytes), C * itemsize * 128)

    # Fused-path VMEM estimate per sample: double-buffered in + out slabs plus
    # the in-kernel f32 temporaries (pooling cast + pre-store product).
    fused_per_n = C * S * (4 * itemsize + 2 * 4)
    if fused_vmem_budget is None:
        fused_vmem_budget = (vmem_limit * 3) // 4

    if 0 < fused_per_n <= fused_vmem_budget:
        # --------------------------- fused single pass -----------------------
        per_n_bytes = max(C * S * itemsize, 1)
        bn = max(1, min(N, target_block_bytes // per_n_bytes, 8))
        bn = max(1, min(bn, fused_vmem_budget // fused_per_n))
        if batch_block is not None:
            bn = max(1, min(N, int(batch_block)))
        grid_n = pl.cdiv(N, bn)
        # Note: with N == 1 this path runs on one v7x TensorCore, but it is only
        # taken for slabs small enough that the loss is a few microseconds; the
        # large-tensor two-pass path below splits work across both cores.

        out_flat = pl.pallas_call(
            functools.partial(_se_fused_kernel, inv_s=1.0 / S, bn=bn),
            out_shape=jax.ShapeDtypeStruct((N, C, S), x.dtype),
            grid_spec=pltpu.PrefetchScalarGridSpec(
                num_scalar_prefetch=0,
                grid=(grid_n,),
                in_specs=[
                    pl.BlockSpec((bn, C, S), lambda n: (n, 0, 0)),
                    pl.BlockSpec((Cr, C), lambda n: (0, 0)),
                    pl.BlockSpec((Cr, 1), lambda n: (0, 0)),
                    pl.BlockSpec((C, Cr), lambda n: (0, 0)),
                    pl.BlockSpec((C, 1), lambda n: (0, 0)),
                ],
                out_specs=pl.BlockSpec((bn, C, S), lambda n: (n, 0, 0)),
            ),
            compiler_params=pltpu.CompilerParams(
                dimension_semantics=("parallel",),
                vmem_limit_bytes=vmem_limit),
            cost_estimate=pl.CostEstimate(
                flops=3 * N * C * S + 4 * N * C * Cr,
                transcendentals=N * C,
                bytes_accessed=2 * N * C * S * itemsize + 2 * C * Cr * itemsize),
        )(x_flat, w1, b1c, w2, b2c)
        return out_flat.reshape(N, C, D, H, W)

    # ------------------------------- two pass --------------------------------
    # Spatial tile sized by bytes (~0.5-4 MiB) so DMA time dominates the
    # ~0.35 us per-grid-step overhead, capped so double-buffered blocks plus
    # in-kernel temporaries stay well inside the scoped VMEM limit.
    ts = _round_up(max(target_block_bytes // max(C * itemsize, 1), 128), 128)
    per_lane_bytes = C * max(2 * itemsize + 3 * 4, 4 * itemsize + 4)
    ts_cap = max(128, (vmem_limit // 2) // per_lane_bytes // 128 * 128)
    ts = min(ts, ts_cap, _round_up(S, 128))
    n_s = pl.cdiv(S, ts)

    if split_spatial is None:
        n_split = 2 if N == 1 else 1       # keep both v7x cores busy when N == 1
    else:
        n_split = int(split_spatial)
    n_split = max(1, min(n_split, n_s))
    spp = pl.cdiv(n_s, n_split)

    def _x_map_a(n, p, s):
        # Clamp so a partition whose last step would fall past the final tile
        # just re-reads the last tile; its contribution is masked to zero.
        return (n, 0, jnp.minimum(p * spp + s, n_s - 1))

    partial = pl.pallas_call(
        functools.partial(_partial_pool_kernel, ts=ts, spp=spp, s_total=S),
        out_shape=jax.ShapeDtypeStruct((N, n_split, C, 1), jnp.float32),
        grid_spec=pltpu.PrefetchScalarGridSpec(
            num_scalar_prefetch=0,
            grid=(N, n_split, spp),
            in_specs=[pl.BlockSpec((1, C, ts), _x_map_a)],
            out_specs=pl.BlockSpec((1, 1, C, 1), lambda n, p, s: (n, p, 0, 0)),
        ),
        compiler_params=pltpu.CompilerParams(
            dimension_semantics=("parallel", "parallel", "arbitrary"),
            vmem_limit_bytes=vmem_limit),
        cost_estimate=pl.CostEstimate(
            flops=2 * N * C * S,
            transcendentals=0,
            bytes_accessed=N * C * S * itemsize + N * n_split * C * 4),
    )(x_flat)

    scale = pl.pallas_call(
        functools.partial(_excite_kernel, inv_s=1.0 / S, n_split=n_split),
        out_shape=jax.ShapeDtypeStruct((N, C, 1), jnp.float32),
        grid_spec=pltpu.PrefetchScalarGridSpec(
            num_scalar_prefetch=0,
            grid=(N,),
            in_specs=[
                pl.BlockSpec((1, n_split, C, 1), lambda n: (n, 0, 0, 0)),
                pl.BlockSpec((Cr, C), lambda n: (0, 0)),
                pl.BlockSpec((Cr, 1), lambda n: (0, 0)),
                pl.BlockSpec((C, Cr), lambda n: (0, 0)),
                pl.BlockSpec((C, 1), lambda n: (0, 0)),
            ],
            out_specs=pl.BlockSpec((1, C, 1), lambda n: (n, 0, 0)),
        ),
        compiler_params=pltpu.CompilerParams(
            dimension_semantics=("parallel",),
            vmem_limit_bytes=vmem_limit),
        cost_estimate=pl.CostEstimate(
            flops=4 * N * C * Cr + 8 * N * C,
            transcendentals=N * C,
            bytes_accessed=N * n_split * C * 4 + N * C * 4 + 2 * C * Cr * 4),
    )(partial, w1, b1c, w2, b2c)

    # Pass B: streaming broadcast rescale; both axes parallel for megacore.
    out_flat = pl.pallas_call(
        _scale_mul_kernel,
        out_shape=jax.ShapeDtypeStruct((N, C, S), x.dtype),
        grid_spec=pltpu.PrefetchScalarGridSpec(
            num_scalar_prefetch=0,
            grid=(N, n_s),
            in_specs=[
                pl.BlockSpec((1, C, ts), lambda n, s: (n, 0, s)),
                pl.BlockSpec((1, C, 1), lambda n, s: (n, 0, 0)),
            ],
            out_specs=pl.BlockSpec((1, C, ts), lambda n, s: (n, 0, s)),
        ),
        compiler_params=pltpu.CompilerParams(
            dimension_semantics=("parallel", "parallel"),
            vmem_limit_bytes=vmem_limit),
        cost_estimate=pl.CostEstimate(
            flops=N * C * S,
            transcendentals=0,
            bytes_accessed=2 * N * C * S * itemsize + N * C * 4),
    )(x_flat, scale)

    return out_flat.reshape(N, C, D, H, W)


def _reference(x, w1, b1, w2, b2):
    # pure-JAX reference mirroring the PyTorch forward
    pooled = jnp.mean(x, axis=(2, 3, 4))                              # (N, C)
    y1 = pooled @ w1.T + b1                                           # (N, Cr)
    y1 = jnp.where(y1 > 0, y1, 0.1 * y1)
    y2 = y1 @ w2.T + b2                                               # (N, C)
    scale = jax.nn.sigmoid(y2)[:, :, None, None, None]
    return x * scale


if __name__ == "__main__":
    key = jax.random.PRNGKey(0)
    C = 8                                   # inplanes = 8 -> bottleneck = 2
    Cr = C // 4
    kx, kw1, kb1, kw2, kb2, kx2, kx3 = jax.random.split(key, 7)

    # Conv3d kernel_size=1 weights are (out, in, 1, 1, 1); we keep (out, in).
    bound1 = 1.0 / (C ** 0.5)
    w1 = jax.random.uniform(kw1, (Cr, C), jnp.float32, -bound1, bound1)
    b1 = jax.random.uniform(kb1, (Cr,), jnp.float32, -bound1, bound1)
    bound2 = 1.0 / (Cr ** 0.5)
    w2 = jax.random.uniform(kw2, (C, Cr), jnp.float32, -bound2, bound2)
    b2 = jax.random.uniform(kb2, (C,), jnp.float32, -bound2, bound2)

    def check(out, ref):
        assert out.shape == ref.shape
        assert jnp.allclose(out, ref, atol=1e-5, rtol=1e-5), \
            float(jnp.max(jnp.abs(out - ref)))

    # 1) fused single-pass path (two samples per grid step)
    x = jax.random.normal(kx, (2, C, 4, 8, 8), dtype=jnp.float32)
    ref = _reference(x, w1, b1, w2, b2)
    check(jax.block_until_ready(se_block_3d(x, w1, b1, w2, b2)), ref)

    # 2) fused path with a partial batch block (N=3, bn=2 -> masked tail writes)
    x3 = jax.random.normal(kx3, (3, C, 4, 8, 8), dtype=jnp.float32)
    ref3 = _reference(x3, w1, b1, w2, b2)
    check(jax.block_until_ready(se_block_3d(x3, w1, b1, w2, b2, batch_block=2)), ref3)

    # 3) fused path with ragged spatial size (S = 3*5*7 = 105, no padding)
    xr = jax.random.normal(kx2, (2, C, 3, 5, 7), dtype=jnp.float32)
    refr = _reference(xr, w1, b1, w2, b2)
    check(jax.block_until_ready(se_block_3d(xr, w1, b1, w2, b2)), refr)

    # 4) two-pass path (pool -> excite -> rescale) with multiple spatial tiles
    check(jax.block_until_ready(
        se_block_3d(x, w1, b1, w2, b2, fused_vmem_budget=0,
                    spatial_block_bytes=4096)), ref)

    # 5) two-pass path with ragged spatial size (masked tail accumulation)
    check(jax.block_until_ready(
        se_block_3d(xr, w1, b1, w2, b2, fused_vmem_budget=0)), refr)

    # 6) two-pass path, N=1 with the spatial axis split across two parallel
    #    partitions (odd tile count exercises the clamped index map)
    x1 = jax.random.normal(kx, (1, C, 5, 8, 8), dtype=jnp.float32)
    ref1 = _reference(x1, w1, b1, w2, b2)
    check(jax.block_until_ready(
        se_block_3d(x1, w1, b1, w2, b2, fused_vmem_budget=0,
                    spatial_block_bytes=4096, split_spatial=2)), ref1)

    print("KERNEL_OK")
</pallas_src>

<mosaic_0001>
module attributes {stable_mosaic.version = 11 : i64} {
  func.func @_se_fused_kernel(%arg0: i32, %arg1: memref<2x8x256xf32, #tpu.memory_space<vmem>>, %arg2: memref<2x8xf32, #tpu.memory_space<vmem>>, %arg3: memref<2x1xf32, #tpu.memory_space<vmem>>, %arg4: memref<8x2xf32, #tpu.memory_space<vmem>>, %arg5: memref<8x1xf32, #tpu.memory_space<vmem>>, %arg6: memref<2x8x256xf32, #tpu.memory_space<vmem>>) attributes {dimension_semantics = [#tpu.dimension_semantics<parallel>], iteration_bounds = array<i64: 1>, scalar_prefetch = 0 : i64, scratch_operands = 0 : i64, tpu.core_type = #tpu.core_type<tc>, window_params = [{transform_indices = @transform_0, window_bounds = array<i64: 2, 8, 256>}, {pipeline_mode = #tpu.pipeline_mode<synchronous>, transform_indices = @transform_1, window_bounds = array<i64: 2, 8>}, {pipeline_mode = #tpu.pipeline_mode<synchronous>, transform_indices = @transform_2, window_bounds = array<i64: 2, 1>}, {pipeline_mode = #tpu.pipeline_mode<synchronous>, transform_indices = @transform_3, window_bounds = array<i64: 8, 2>}, {pipeline_mode = #tpu.pipeline_mode<synchronous>, transform_indices = @transform_4, window_bounds = array<i64: 8, 1>}, {transform_indices = @transform_5, window_bounds = array<i64: 2, 8, 256>}]} {
    %c0 = arith.constant 0 : index
    %c0_0 = arith.constant 0 : index
    %c0_1 = arith.constant 0 : index
    %0 = vector.load %arg1[%c0, %c0_0, %c0_1] : memref<2x8x256xf32, #tpu.memory_space<vmem>>, vector<1x8x256xf32>
    %1 = vector.shape_cast %0 : vector<1x8x256xf32> to vector<8x256xf32>
    %cst = arith.constant dense<0.000000e+00> : vector<8xf32>
    %2 = vector.multi_reduction <add>, %1, %cst [1] : vector<8x256xf32> to vector<8xf32>
    %3 = vector.shape_cast %2 : vector<8xf32> to vector<8x1xf32>
    %cst_2 = arith.constant 3.906250e-03 : f32
    %4 = vector.broadcast %cst_2 : f32 to vector<8x1xf32>
    %5 = arith.mulf %3, %4 : vector<8x1xf32>
    %c0_3 = arith.constant 0 : index
    %c0_4 = arith.constant 0 : index
    %6 = vector.load %arg2[%c0_3, %c0_4] : memref<2x8xf32, #tpu.memory_space<vmem>>, vector<2x8xf32>
    %cst_5 = arith.constant dense<0.000000e+00> : vector<2x1xf32>
    %7 = tpu.matmul %6, %5, %cst_5 {dimension_numbers = #tpu.dot_dimension_numbers<[1], [0], [0], [1], [0, 0, 1, 1], [], []>} : vector<2x8xf32>, vector<8x1xf32>, vector<2x1xf32> -> vector<2x1xf32>
    %c0_6 = arith.constant 0 : index
    %c0_7 = arith.constant 0 : index
    %8 = vector.load %arg3[%c0_6, %c0_7] : memref<2x1xf32, #tpu.memory_space<vmem>>, vector<2x1xf32>
    %9 = arith.addf %7, %8 : vector<2x1xf32>
    %cst_8 = arith.constant 0.000000e+00 : f32
    %10 = vector.broadcast %cst_8 : f32 to vector<2x1xf32>
    %11 = arith.cmpf ogt, %9, %10 : vector<2x1xf32>
    %cst_9 = arith.constant 1.000000e-01 : f32
    %12 = vector.broadcast %cst_9 : f32 to vector<2x1xf32>
    %13 = arith.mulf %12, %9 : vector<2x1xf32>
    %14 = arith.select %11, %9, %13 : vector<2x1xi1>, vector<2x1xf32>
    %c0_10 = arith.constant 0 : index
    %c0_11 = arith.constant 0 : index
    %15 = vector.load %arg4[%c0_10, %c0_11] : memref<8x2xf32, #tpu.memory_space<vmem>>, vector<8x2xf32>
    %cst_12 = arith.constant dense<0.000000e+00> : vector<8x1xf32>
    %16 = tpu.matmul %15, %14, %cst_12 {dimension_numbers = #tpu.dot_dimension_numbers<[1], [0], [0], [1], [0, 0, 1, 1], [], []>} : vector<8x2xf32>, vector<2x1xf32>, vector<8x1xf32> -> vector<8x1xf32>
    %c0_13 = arith.constant 0 : index
    %c0_14 = arith.constant 0 : index
    %17 = vector.load %arg5[%c0_13, %c0_14] : memref<8x1xf32, #tpu.memory_space<vmem>>, vector<8x1xf32>
    %18 = arith.addf %16, %17 : vector<8x1xf32>
    %cst_15 = arith.constant 0.000000e+00 : f32
    %19 = vector.broadcast %cst_15 : f32 to vector<8x1xf32>
    %20 = arith.subf %19, %18 : vector<8x1xf32>
    %21 = math.exp %20 : vector<8x1xf32>
    %cst_16 = arith.constant 1.000000e+00 : f32
    %22 = vector.broadcast %cst_16 : f32 to vector<8x1xf32>
    %23 = arith.addf %22, %21 : vector<8x1xf32>
    %24 = tpu.reciprocal %23 : vector<8x1xf32> -> vector<8x1xf32>
    %25 = vector.broadcast %24 : vector<8x1xf32> to vector<8x256xf32>
    %26 = arith.mulf %1, %25 : vector<8x256xf32>
    %c0_17 = arith.constant 0 : index
    %c0_18 = arith.constant 0 : index
    %c0_19 = arith.constant 0 : index
    %27 = vector.load %arg6[%c0_17, %c0_18, %c0_19] : memref<2x8x256xf32, #tpu.memory_space<vmem>>, vector<1x8x256xf32>
    %28 = vector.shape_cast %27 : vector<1x8x256xf32> to vector<8x256xf32>
    %29 = vector.shape_cast %26 : vector<8x256xf32> to vector<1x8x256xf32>
    tpu.vector_store %arg6[%c0_17, %c0_18, %c0_19], %29 {strides = array<i32>} : memref<2x8x256xf32, #tpu.memory_space<vmem>>, vector<1x8x256xf32>,
    %c1 = arith.constant 1 : index
    %c0_20 = arith.constant 0 : index
    %c0_21 = arith.constant 0 : index
    %30 = vector.load %arg1[%c1, %c0_20, %c0_21] : memref<2x8x256xf32, #tpu.memory_space<vmem>>, vector<1x8x256xf32>
    %31 = vector.shape_cast %30 : vector<1x8x256xf32> to vector<8x256xf32>
    %cst_22 = arith.constant dense<0.000000e+00> : vector<8xf32>
    %32 = vector.multi_reduction <add>, %31, %cst_22 [1] : vector<8x256xf32> to vector<8xf32>
    %33 = vector.shape_cast %32 : vector<8xf32> to vector<8x1xf32>
    %cst_23 = arith.constant 3.906250e-03 : f32
    %34 = vector.broadcast %cst_23 : f32 to vector<8x1xf32>
    %35 = arith.mulf %33, %34 : vector<8x1xf32>
    %c0_24 = arith.constant 0 : index
    %c0_25 = arith.constant 0 : index
    %36 = vector.load %arg2[%c0_24, %c0_25] : memref<2x8xf32, #tpu.memory_space<vmem>>, vector<2x8xf32>
    %cst_26 = arith.constant dense<0.000000e+00> : vector<2x1xf32>
    %37 = tpu.matmul %36, %35, %cst_26 {dimension_numbers = #tpu.dot_dimension_numbers<[1], [0], [0], [1], [0, 0, 1, 1], [], []>} : vector<2x8xf32>, vector<8x1xf32>, vector<2x1xf32> -> vector<2x1xf32>
    %c0_27 = arith.constant 0 : index
    %c0_28 = arith.constant 0 : index
    %38 = vector.load %arg3[%c0_27, %c0_28] : memref<2x1xf32, #tpu.memory_space<vmem>>, vector<2x1xf32>
    %39 = arith.addf %37, %38 : vector<2x1xf32>
    %cst_29 = arith.constant 0.000000e+00 : f32
    %40 = vector.broadcast %cst_29 : f32 to vector<2x1xf32>
    %41 = arith.cmpf ogt, %39, %40 : vector<2x1xf32>
    %cst_30 = arith.constant 1.000000e-01 : f32
    %42 = vector.broadcast %cst_30 : f32 to vector<2x1xf32>
    %43 = arith.mulf %42, %39 : vector<2x1xf32>
    %44 = arith.select %41, %39, %43 : vector<2x1xi1>, vector<2x1xf32>
    %c0_31 = arith.constant 0 : index
    %c0_32 = arith.constant 0 : index
    %45 = vector.load %arg4[%c0_31, %c0_32] : memref<8x2xf32, #tpu.memory_space<vmem>>, vector<8x2xf32>
    %cst_33 = arith.constant dense<0.000000e+00> : vector<8x1xf32>
    %46 = tpu.matmul %45, %44, %cst_33 {dimension_numbers = #tpu.dot_dimension_numbers<[1], [0], [0], [1], [0, 0, 1, 1], [], []>} : vector<8x2xf32>, vector<2x1xf32>, vector<8x1xf32> -> vector<8x1xf32>
    %c0_34 = arith.constant 0 : index
    %c0_35 = arith.constant 0 : index
    %47 = vector.load %arg5[%c0_34, %c0_35] : memref<8x1xf32, #tpu.memory_space<vmem>>, vector<8x1xf32>
    %48 = arith.addf %46, %47 : vector<8x1xf32>
    %cst_36 = arith.constant 0.000000e+00 : f32
    %49 = vector.broadcast %cst_36 : f32 to vector<8x1xf32>
    %50 = arith.subf %49, %48 : vector<8x1xf32>
    %51 = math.exp %50 : vector<8x1xf32>
    %cst_37 = arith.constant 1.000000e+00 : f32
    %52 = vector.broadcast %cst_37 : f32 to vector<8x1xf32>
    %53 = arith.addf %52, %51 : vector<8x1xf32>
    %54 = tpu.reciprocal %53 : vector<8x1xf32> -> vector<8x1xf32>
    %55 = vector.broadcast %54 : vector<8x1xf32> to vector<8x256xf32>
    %56 = arith.mulf %31, %55 : vector<8x256xf32>
    %c1_38 = arith.constant 1 : index
    %c0_39 = arith.constant 0 : index
    %c0_40 = arith.constant 0 : index
    %57 = vector.load %arg6[%c1_38, %c0_39, %c0_40] : memref<2x8x256xf32, #tpu.memory_space<vmem>>, vector<1x8x256xf32>
    %58 = vector.shape_cast %57 : vector<1x8x256xf32> to vector<8x256xf32>
    %59 = vector.shape_cast %56 : vector<8x256xf32> to vector<1x8x256xf32>
    tpu.vector_store %arg6[%c1_38, %c0_39, %c0_40], %59 {strides = array<i32>} : memref<2x8x256xf32, #tpu.memory_space<vmem>>, vector<1x8x256xf32>,
    return
  }
  func.func @transform_0(%arg0: i32) -> (i32, i32, i32) {
    %c0_i32 = arith.constant 0 : i32
    %c0_i32_0 = arith.constant 0 : i32
    %c0_i32_1 = arith.constant 0 : i32
    return %arg0, %c0_i32, %c0_i32_0 : i32, i32, i32
  }
  func.func @transform_1(%arg0: i32) -> (i32, i32) {
    %c0_i32 = arith.constant 0 : i32
    %c0_i32_0 = arith.constant 0 : i32
    %c0_i32_1 = arith.constant 0 : i32
    return %c0_i32, %c0_i32_0 : i32, i32
  }
  func.func @transform_2(%arg0: i32) -> (i32, i32) {
    %c0_i32 = arith.constant 0 : i32
    %c0_i32_0 = arith.constant 0 : i32
    %c0_i32_1 = arith.constant 0 : i32
    return %c0_i32, %c0_i32_0 : i32, i32
  }
  func.func @transform_3(%arg0: i32) -> (i32, i32) {
    %c0_i32 = arith.constant 0 : i32
    %c0_i32_0 = arith.constant 0 : i32
    %c0_i32_1 = arith.constant 0 : i32
    return %c0_i32, %c0_i32_0 : i32, i32
  }
  func.func @transform_4(%arg0: i32) -> (i32, i32) {
    %c0_i32 = arith.constant 0 : i32
    %c0_i32_0 = arith.constant 0 : i32
    %c0_i32_1 = arith.constant 0 : i32
    return %c0_i32, %c0_i32_0 : i32, i32
  }
  func.func @transform_5(%arg0: i32) -> (i32, i32, i32) {
    %c0_i32 = arith.constant 0 : i32
    %c0_i32_0 = arith.constant 0 : i32
    %c0_i32_1 = arith.constant 0 : i32
    return %arg0, %c0_i32, %c0_i32_0 : i32, i32, i32
  }
}

</mosaic_0001>

<llo_original>
// kernel: tpu_custom_call.1
$region0: #{tpu_custom_call.1}
  #allocation0 [shape = 'u32[]', space=smem, size = 0x4, offset = 0x4, fixed_abs, tag = 'smem constant byte address 0x4 - core index']
  #allocation1 [shape = 'u32[72,128]{1,0:T(1,128)}', space=vmem, size = 0x9000, scoped, tag = 'internal scratch']
  %s0 = inlined_call_operand.hbm [shape: f32[2,8,256], index: 0, kind: input, shape index: {}]
  %s1 = inlined_call_operand.vmem [shape: f32[2,8], index: 1, kind: input, shape index: {}]
  %s2 = inlined_call_operand.vmem [shape: f32[2,1], index: 2, kind: input, shape index: {}]
  %s3 = inlined_call_operand.vmem [shape: f32[8,2], index: 3, kind: input, shape index: {}]
  %s4 = inlined_call_operand.vmem [shape: f32[8,1], index: 4, kind: input, shape index: {}]
  %s5 = inlined_call_operand.hbm [shape: f32[2,8,256], index: 5, kind: output, shape index: {}]
  %s6 = sld [smem:[#allocation0]]
  $region34: #{tpu_custom_call.1} parent=0
    _
  %s8 = ssub.s32 1, %s6
  %s9 = scalar_select 0, %s8, %s6
  $region1: #{tpu_custom_call.1} parent=0
    #allocation2 [shape = 'u8[16384]{0}', space=vmem, size = 0x4000, scoped, tag = 'input window, operand 0, single buffered']
    #allocation3 [shape = 's32[1]{0}', space=sflag, size = 0x4, scoped, tag = 'scoped memory for tpu_custom_call.1']
    #allocation4 [shape = 's32[1]{0}', space=sflag, size = 0x4, scoped, tag = 'scoped memory for tpu_custom_call.1']
    #allocation5 [shape = 'u8[16384]{0}', space=vmem, size = 0x4000, scoped, tag = 'output window, operand 0, single buffered']
    %10 = vsyncpa [#allocation3], 0
    %11 = vsyncpa [#allocation4], 0
    // Predicated region
    $region2: #{tpu_custom_call.1} parent=1 // pred_check
      _
    $region3: #{tpu_custom_call.1} parent=1 // pred_check_branch
      %13 = sbr.rel (0) target = $region5
    $region4: #{tpu_custom_call.1} parent=1 // pred_region
      %15 = vsyncadd [#allocation3], 0
      %s16 = sshll.u32 %s0, 4
      %s17 = int_to_ptr.hbm [resolvable:$true] %s16
      %s18 = sshll.u32 [#allocation2], 4
      %s19 = int_to_ptr.vmem [resolvable:$true] %s18
      %24 = dma.hbm_to_vmem [thread:$0]  %s17, 512, %s19, [#allocation3], 256, 256, 16
    $region5: #{tpu_custom_call.1} parent=1 // pred_fallthru
      _
    // Predicated region
    $region6: #{tpu_custom_call.1} parent=1 // pred_check
      _
    $region7: #{tpu_custom_call.1} parent=1 // pred_check_branch
      %26 = sbr.rel (0) target = $region9
    $region8: #{tpu_custom_call.1} parent=1 // pred_region
      _
    $region9: #{tpu_custom_call.1} parent=1 // pred_fallthru
      _
    // Predicated region
    $region10: #{tpu_custom_call.1} parent=1 // pred_check
      _
    $region11: #{tpu_custom_call.1} parent=1 // pred_check_branch
      %28 = sbr.rel (0) target = $region13
    $region12: #{tpu_custom_call.1} parent=1 // pred_region
      _
    $region13: #{tpu_custom_call.1} parent=1 // pred_fallthru
      _
    // Predicated region
    $region14: #{tpu_custom_call.1} parent=1 // pred_check
      _
    $region15: #{tpu_custom_call.1} parent=1 // pred_check_branch
      %30 = sbr.rel (0) target = $region17
    $region16: #{tpu_custom_call.1} parent=1 // pred_region
      _
    $region17: #{tpu_custom_call.1} parent=1 // pred_fallthru
      _
    // Predicated region
    $region18: #{tpu_custom_call.1} parent=1 // pred_check
      _
    $region19: #{tpu_custom_call.1} parent=1 // pred_check_branch
      %32 = sbr.rel (0) target = $region21
    $region20: #{tpu_custom_call.1} parent=1 // pred_region
      _
    $region21: #{tpu_custom_call.1} parent=1 // pred_fallthru
      _
    // Predicated region
    $region22: #{tpu_custom_call.1} parent=1 // pred_check
      _
    $region23: #{tpu_custom_call.1} parent=1 // pred_check_branch
      %34 = sbr.rel (0) target = $region25
    $region24: #{tpu_custom_call.1} parent=1 // pred_region
      %36 = dma.done [#allocation3], 512
    $region25: #{tpu_custom_call.1} parent=1 // pred_fallthru
      _
    %v37 = vld [vmem:[#allocation2] sm:$0xff]
    %v38 = vld [vmem:[#allocation2 + $0x8] sm:$0xff]
    %v39 = vadd.f32 %v37, %v38
    %40 = vadd.xlane.f32.xlu0 %v39
    %v41 = vpop.xlane.xlu0 %40
    %v42 = vmul.f32 %v41, 0.00390625
    %v43 = vld [vmem:[%s1] sm:$0x3]
    %v44 = vld [vmem:[%s2] sm:$0x3]
    %vm45 = vcmask 64512
    %v47 = vsel %vm45, %v43, 0
    %49 = vmatpush.msra.mxu0 0.0
    %50 = vmatpush.msra.mxu0 0.0
    %51 = vmatpush.msra.mxu0 0.0
    %52 = vmatpush.msra.mxu0 0.0
    %53 = vmatpush.msra.mxu0 0.0
    %54 = vmatpush.msra.mxu0 0.0
    %55 = vmatpush.msra.mxu0 0.0
    %56 = vmatpush.msra.mxu0 0.0
    %57 = vmatpush.msra.mxu0 0.0
    %58 = vmatpush.msra.mxu0 0.0
    %59 = vmatpush.msra.mxu0 0.0
    %60 = vmatpush.msra.mxu0 0.0
    %61 = vmatpush.msra.mxu0 0.0
    %62 = vmatpush.msra.mxu0 0.0
    %63 = vmatpush.msra.mxu0 0.0
    %64 = vmatpush.msra.mxu0 %v42
    %65 = vmatmul.f32.gmra.mxu0 %v47
    %v66 = vpop.f32.mrf.mxu0
    %v67 = vadd.f32 %v44, %v66
    %68 = vdwg.mxu0
    %vm69 = vcmp.gt.f32.partialorder %v67, 0.0
    %v70 = vmul.f32 %v67, 0.1
    %v71 = vsel %vm69, %v67, %v70
    %v72 = vld [vmem:[%s3] sm:$0xff]
    %v73 = vld [vmem:[%s4] sm:$0xff]
    %vm74 = vcmask 15360
    %v76 = vsel %vm74, %v72, 0
    %vm78 = vcmask 1041408
    %v80 = vsel %vm78, %v71, 0
    %82 = vmatpush.msra.mxu0 0.0
    %83 = vmatpush.msra.mxu0 0.0
    %84 = vmatpush.msra.mxu0 0.0
    %85 = vmatpush.msra.mxu0 0.0
    %86 = vmatpush.msra.mxu0 0.0
    %87 = vmatpush.msra.mxu0 0.0
    %88 = vmatpush.msra.mxu0 0.0
    %89 = vmatpush.msra.mxu0 0.0
    %90 = vmatpush.msra.mxu0 0.0
    %91 = vmatpush.msra.mxu0 0.0
    %92 = vmatpush.msra.mxu0 0.0
    %93 = vmatpush.msra.mxu0 0.0
    %94 = vmatpush.msra.mxu0 0.0
    %95 = vmatpush.msra.mxu0 0.0
    %96 = vmatpush.msra.mxu0 0.0
    %97 = vmatpush.msra.mxu0 %v80
    %98 = vmatmul.f32.gmra.mxu0 %v76
    %v99 = vpop.f32.mrf.mxu0
    %v100 = vadd.f32 %v73, %v99
    %101 = vdwg.mxu0
    %v102 = vsub.f32 0.0, %v100
    %v103 = vmul.f32 %v102, 1.442695
    %v104 = vpow.pop %v103
    %v105 = vadd.f32 %v104, 1.0
    %v106 = vrcp.pop %v105
    %v107 = vmul.f32 %v105, %v106
    %v108 = vsub.f32 1.0, %v107
    %v109 = vmul.f32 %v106, %v108
    %v110 = vadd.f32 %v106, %v109
    %vm111 = vweird.f32 %v105
    %vm112 = vweird.f32 %v106
    %vm113 = vmor %vm111, %vm112
    %v114 = vsel %vm113, %v106, %v110
    %v115 = vand.u32 2147483647, %v105
    %vm116 = vcmp.eq.f32.partialorder %v115, 8.507059e+37
    %v117 = vand.u32 %v105, 2147483648
    %v118 = vor.u32 1.1754944e-38, %v117
    %v119 = vsel %vm116, %v118, %v114
    %121 = vset.pattern.permute.xlu0 0
    %122 = vperm.xlu0 %121, %v119
    %v123 = vpop.permute.xlu0 %122
    %v125 = vmul.f32 %v37, %v123
    %v126 = vmul.f32 %v38, %v123
    %127 = vst [vmem:[#allocation5] sm:$0xff] %v125
    %128 = vst [vmem:[#allocation5 + $0x8] sm:$0xff] %v126
    %s129 = scalar_lea.vmem [#allocation2], 16
    %v130 = vld [vmem:[%s129] sm:$0xff]
    %v131 = vld [vmem:[%s129 + $0x8] sm:$0xff]
    %v132 = vadd.f32 %v130, %v131
    %133 = vadd.xlane.f32.xlu0 %v132
    %v134 = vpop.xlane.xlu0 %133
    %v135 = vmul.f32 %v134, 0.00390625
    %v136 = vld [vmem:[%s1] sm:$0x3]
    %v137 = vld [vmem:[%s2] sm:$0x3]
    %v139 = vsel %vm45, %v136, 0
    %141 = vmatpush.msra.mxu0 0.0
    %142 = vmatpush.msra.mxu0 0.0
    %143 = vmatpush.msra.mxu0 0.0
    %144 = vmatpush.msra.mxu0 0.0
    %145 = vmatpush.msra.mxu0 0.0
    %146 = vmatpush.msra.mxu0 0.0
    %147 = vmatpush.msra.mxu0 0.0
    %148 = vmatpush.msra.mxu0 0.0
    %149 = vmatpush.msra.mxu0 0.0
    %150 = vmatpush.msra.mxu0 0.0
    %151 = vmatpush.msra.mxu0 0.0
    %152 = vmatpush.msra.mxu0 0.0
    %153 = vmatpush.msra.mxu0 0.0
    %154 = vmatpush.msra.mxu0 0.0
    %155 = vmatpush.msra.mxu0 0.0
    %156 = vmatpush.msra.mxu0 %v135
    %157 = vmatmul.f32.gmra.mxu0 %v139
    %v158 = vpop.f32.mrf.mxu0
    %v159 = vadd.f32 %v137, %v158
    %160 = vdwg.mxu0
    %vm161 = vcmp.gt.f32.partialorder %v159, 0.0
    %v162 = vmul.f32 %v159, 0.1
    %v163 = vsel %vm161, %v159, %v162
    %v164 = vld [vmem:[%s3] sm:$0xff]
    %v165 = vld [vmem:[%s4] sm:$0xff]
    %v167 = vsel %vm74, %v164, 0
    %v170 = vsel %vm78, %v163, 0
    %172 = vmatpush.msra.mxu0 0.0
    %173 = vmatpush.msra.mxu0 0.0
    %174 = vmatpush.msra.mxu0 0.0
    %175 = vmatpush.msra.mxu0 0.0
    %176 = vmatpush.msra.mxu0 0.0
    %177 = vmatpush.msra.mxu0 0.0
    %178 = vmatpush.msra.mxu0 0.0
    %179 = vmatpush.msra.mxu0 0.0
    %180 = vmatpush.msra.mxu0 0.0
    %181 = vmatpush.msra.mxu0 0.0
    %182 = vmatpush.msra.mxu0 0.0
    %183 = vmatpush.msra.mxu0 0.0
    %184 = vmatpush.msra.mxu0 0.0
    %185 = vmatpush.msra.mxu0 0.0
    %186 = vmatpush.msra.mxu0 0.0
    %187 = vmatpush.msra.mxu0 %v170
    %188 = vmatmul.f32.gmra.mxu0 %v167
    %v189 = vpop.f32.mrf.mxu0
    %v190 = vadd.f32 %v165, %v189
    %191 = vdwg.mxu0
    %v192 = vsub.f32 0.0, %v190
    %v193 = vmul.f32 %v192, 1.442695
    %v194 = vpow.pop %v193
    %v195 = vadd.f32 %v194, 1.0
    %v196 = vrcp.pop %v195
    %v197 = vmul.f32 %v195, %v196
    %v198 = vsub.f32 1.0, %v197
    %v199 = vmul.f32 %v196, %v198
    %v200 = vadd.f32 %v196, %v199
    %vm201 = vweird.f32 %v195
    %vm202 = vweird.f32 %v196
    %vm203 = vmor %vm201, %vm202
    %v204 = vsel %vm203, %v196, %v200
    %v205 = vand.u32 2147483647, %v195
    %vm206 = vcmp.eq.f32.partialorder %v205, 8.507059e+37
    %v207 = vand.u32 %v195, 2147483648
    %v208 = vor.u32 1.1754944e-38, %v207
    %v209 = vsel %vm206, %v208, %v204
    %211 = vset.pattern.permute.xlu0 0
    %212 = vperm.xlu0 %211, %v209
    %v213 = vpop.permute.xlu0 %212
    %v215 = vmul.f32 %v130, %v213
    %v216 = vmul.f32 %v131, %v213
    %s217 = scalar_lea.vmem [#allocation5], 16
    %218 = vst [vmem:[%s217] sm:$0xff] %v215
    %219 = vst [vmem:[%s217 + $0x8] sm:$0xff] %v216
    // Predicated region
    $region26: #{tpu_custom_call.1} parent=1 // pred_check
      _
    $region27: #{tpu_custom_call.1} parent=1 // pred_check_branch
      %221 = sbr.rel (0) target = $region29
    $region28: #{tpu_custom_call.1} parent=1 // pred_region
      %223 = vsyncadd [#allocation4], 0
      %s224 = sshll.u32 [#allocation5], 4
      %s225 = int_to_ptr.vmem [resolvable:$true] %s224
      %s226 = sshll.u32 %s5, 4
      %s227 = int_to_ptr.hbm [resolvable:$true] %s226
      %232 = dma.vmem_to_hbm [thread:$0]  %s225, 512, %s227, [#allocation4], 256, 256, 16
    $region29: #{tpu_custom_call.1} parent=1 // pred_fallthru
      _
    // Predicated region
    $region30: #{tpu_custom_call.1} parent=1 // pred_check
      _
    $region31: #{tpu_custom_call.1} parent=1 // pred_check_branch
      %234 = sbr.rel (0) target = $region33
    $region32: #{tpu_custom_call.1} parent=1 // pred_region
      %236 = dma.done [#allocation4], 512
    $region33: #{tpu_custom_call.1} parent=1 // pred_fallthru
      _
    %237 = vsyncpa [#allocation3], 1
    %238 = vsyncpa [#allocation4], 1

</llo_original>
